<compile_context>
chip_gen: v5e
topology: v5e:2x2
jax: 0.10.0
libtpu: 0.0.40
codegen_flags: <defaults>
</compile_context>

<pallas_src>
from math import pi

import jax
import jax.numpy as jnp
from jax import lax
from jax.experimental import pallas as pl
from jax.experimental.pallas import tpu as pltpu

N_COS = 64  # IQN cosine-embedding size (fixed by the module)


def _round_up(x, n):
    return (x + n - 1) // n * n


def _quantile_kernel(alpha_ref, tau_ref, pik_ref, w1_ref, b1_ref, w2_ref,
                     b2_ref, out_ref):
    # cos embedding: cos(pi * k * tau_i), k = 0..63  ->  (tm, 64) f32 (EUP path)
    phi = jnp.cos(tau_ref[...] * pik_ref[...])

    # Linear(64, 64): f32 MXU operands, explicit f32 accumulation.
    h = jnp.dot(phi, w1_ref[...], preferred_element_type=jnp.float32) + b1_ref[...]

    # PReLU with a single shared parameter alpha (scalar from SMEM).
    alpha = alpha_ref[0]
    h = jnp.where(h > 0, h, alpha * h)

    # Linear(64, num_output).
    out = jnp.dot(h, w2_ref[...], preferred_element_type=jnp.float32) + b2_ref[...]
    out_ref[...] = out.astype(out_ref.dtype)


def quantile_layer(tau, w1, b1, alpha, w2, b2, *, tile_m=4096):
    """tau: arbitrary-shape f32 array; weights stored transposed as (in, out).

    Returns an array of shape tau.shape + (num_output,), matching
    QuantileLayer.forward.
    """
    orig_shape = tau.shape
    m = 1
    for s in orig_shape:
        m *= s
    num_output = w2.shape[1]

    # Rows per grid step: a multiple of 8 sublanes, capped so the grid has at
    # least 2 steps when possible (lets v7x shard the row axis over both TCs).
    tm = _round_up(min(int(tile_m), max(pl.cdiv(m, 2), 1)), 8)
    grid_m = pl.cdiv(m, tm)

    tau2d = tau.reshape(m, 1).astype(jnp.float32)                       # (m, 1)
    pik = (jnp.float32(pi)
           * jnp.arange(N_COS, dtype=jnp.float32)).reshape(1, N_COS)    # (1, 64)
    w1_f = w1.astype(jnp.float32)                                       # (64, 64)
    b1_2d = b1.reshape(1, N_COS).astype(jnp.float32)                    # (1, 64)
    w2_f = w2.astype(jnp.float32)                                       # (64, num_output)
    b2_2d = b2.reshape(1, num_output).astype(jnp.float32)               # (1, num_output)
    alpha_sm = jnp.asarray(alpha, jnp.float32).reshape(1)               # (1,) scalar

    out = pl.pallas_call(
        _quantile_kernel,
        out_shape=jax.ShapeDtypeStruct((m, num_output), jnp.float32),
        grid=(grid_m,),
        in_specs=[
            pl.BlockSpec(memory_space=pltpu.MemorySpace.SMEM),      # alpha (scalar)
            pl.BlockSpec((tm, 1), lambda i: (i, 0)),                # tau tile
            pl.BlockSpec((1, N_COS), lambda i: (0, 0)),             # pi*k (resident)
            pl.BlockSpec((N_COS, N_COS), lambda i: (0, 0)),         # w1 (resident)
            pl.BlockSpec((1, N_COS), lambda i: (0, 0)),             # b1 (resident)
            pl.BlockSpec((N_COS, num_output), lambda i: (0, 0)),    # w2 (resident)
            pl.BlockSpec((1, num_output), lambda i: (0, 0)),        # b2 (resident)
        ],
        out_specs=pl.BlockSpec((tm, num_output), lambda i: (i, 0)),
        compiler_params=pltpu.CompilerParams(
            dimension_semantics=("parallel",)),
    )(alpha_sm, tau2d, pik, w1_f, b1_2d, w2_f, b2_2d)

    # Contiguous (free) reshape only -- no post-kernel slice copy.
    return out.reshape(orig_shape + (num_output,))


def _reference_f32(tau, w1, b1, alpha, w2, b2):
    """Pure-JAX f32 reference mirroring the PyTorch forward exactly."""
    k = jnp.arange(N_COS, dtype=jnp.float32)
    phi = jnp.cos(jnp.float32(pi) * tau[..., None] * k)
    h = jnp.dot(phi, w1, precision=lax.Precision.HIGHEST) + b1
    h = jnp.where(h > 0, h, alpha * h)
    return jnp.dot(h, w2, precision=lax.Precision.HIGHEST) + b2


if __name__ == "__main__":
    num_output = 32

    key = jax.random.PRNGKey(0)
    k_tau, k_tau2, k_w1, k_b1, k_w2, k_b2 = jax.random.split(key, 6)

    # Deterministic synthetic parameters (shapes match nn.Linear(64,64),
    # PReLU(), nn.Linear(64,num_output)); weights stored transposed (in, out).
    bound1 = 1.0 / (N_COS ** 0.5)
    w1 = jax.random.uniform(k_w1, (N_COS, N_COS), jnp.float32, -bound1, bound1)
    b1 = jax.random.uniform(k_b1, (N_COS,), jnp.float32, -bound1, bound1)
    alpha = jnp.array(0.25, dtype=jnp.float32)   # PReLU default init
    w2 = jax.random.uniform(k_w2, (N_COS, num_output), jnp.float32, -bound1, bound1)
    b2 = jax.random.uniform(k_b2, (num_output,), jnp.float32, -bound1, bound1)

    # Small shape per the module spec (quantile levels tau in [0, 1)).
    tau_small = jax.random.uniform(k_tau, (2, 8), jnp.float32)
    # Larger shape exercising the multi-step grid (m=1200 -> 2 tiles of 600 rows).
    tau_big = jax.random.uniform(k_tau2, (4, 300), jnp.float32)

    for tau in (tau_small, tau_big):
        out = jax.block_until_ready(quantile_layer(tau, w1, b1, alpha, w2, b2))
        assert out.shape == tau.shape + (num_output,), out.shape

        ref = _reference_f32(tau, w1, b1, alpha, w2, b2)
        assert jnp.allclose(out, ref, atol=1e-2, rtol=1e-2), \
            float(jnp.max(jnp.abs(out - ref)))
        assert bool(jnp.all(jnp.isfinite(out)))

    print("KERNEL_OK")
</pallas_src>

<mosaic_0001>
module attributes {stable_mosaic.version = 11 : i64} {
  func.func @_quantile_kernel(%arg0: i32, %arg1: memref<1xf32, #tpu.memory_space<smem>>, %arg2: memref<8x1xf32, #tpu.memory_space<vmem>>, %arg3: memref<1x64xf32, #tpu.memory_space<vmem>>, %arg4: memref<64x64xf32, #tpu.memory_space<vmem>>, %arg5: memref<1x64xf32, #tpu.memory_space<vmem>>, %arg6: memref<64x32xf32, #tpu.memory_space<vmem>>, %arg7: memref<1x32xf32, #tpu.memory_space<vmem>>, %arg8: memref<8x32xf32, #tpu.memory_space<vmem>>) attributes {dimension_semantics = [#tpu.dimension_semantics<parallel>], iteration_bounds = array<i64: 2>, scalar_prefetch = 0 : i64, scratch_operands = 0 : i64, tpu.core_type = #tpu.core_type<tc>, window_params = [{transform_indices = @transform_0, window_bounds = array<i64: 1>}, {transform_indices = @transform_1, window_bounds = array<i64: 8, 1>}, {pipeline_mode = #tpu.pipeline_mode<synchronous>, transform_indices = @transform_2, window_bounds = array<i64: 1, 64>}, {pipeline_mode = #tpu.pipeline_mode<synchronous>, transform_indices = @transform_3, window_bounds = array<i64: 64, 64>}, {pipeline_mode = #tpu.pipeline_mode<synchronous>, transform_indices = @transform_4, window_bounds = array<i64: 1, 64>}, {pipeline_mode = #tpu.pipeline_mode<synchronous>, transform_indices = @transform_5, window_bounds = array<i64: 64, 32>}, {pipeline_mode = #tpu.pipeline_mode<synchronous>, transform_indices = @transform_6, window_bounds = array<i64: 1, 32>}, {transform_indices = @transform_7, window_bounds = array<i64: 8, 32>}]} {
    %c0 = arith.constant 0 : index
    %c0_0 = arith.constant 0 : index
    %0 = vector.load %arg2[%c0, %c0_0] : memref<8x1xf32, #tpu.memory_space<vmem>>, vector<8x1xf32>
    %c0_1 = arith.constant 0 : index
    %c0_2 = arith.constant 0 : index
    %1 = vector.load %arg3[%c0_1, %c0_2] : memref<1x64xf32, #tpu.memory_space<vmem>>, vector<1x64xf32>
    %2 = vector.broadcast %0 : vector<8x1xf32> to vector<8x64xf32>
    %3 = vector.broadcast %1 : vector<1x64xf32> to vector<8x64xf32>
    %4 = arith.mulf %2, %3 : vector<8x64xf32>
    %5 = math.cos %4 : vector<8x64xf32>
    %c0_3 = arith.constant 0 : index
    %c0_4 = arith.constant 0 : index
    %6 = vector.load %arg4[%c0_3, %c0_4] : memref<64x64xf32, #tpu.memory_space<vmem>>, vector<64x64xf32>
    %cst = arith.constant dense<0.000000e+00> : vector<8x64xf32>
    %7 = tpu.matmul %5, %6, %cst {dimension_numbers = #tpu.dot_dimension_numbers<[1], [0], [0], [1], [0, 0, 1, 1], [], []>} : vector<8x64xf32>, vector<64x64xf32>, vector<8x64xf32> -> vector<8x64xf32>
    %c0_5 = arith.constant 0 : index
    %c0_6 = arith.constant 0 : index
    %8 = vector.load %arg5[%c0_5, %c0_6] : memref<1x64xf32, #tpu.memory_space<vmem>>, vector<1x64xf32>
    %9 = vector.broadcast %8 : vector<1x64xf32> to vector<8x64xf32>
    %10 = arith.addf %7, %9 : vector<8x64xf32>
    %c0_7 = arith.constant 0 : index
    %11 = memref.load %arg1[%c0_7] : memref<1xf32, #tpu.memory_space<smem>>
    %cst_8 = arith.constant 0.000000e+00 : f32
    %12 = vector.broadcast %cst_8 : f32 to vector<8x64xf32>
    %13 = arith.cmpf ogt, %10, %12 : vector<8x64xf32>
    %14 = vector.broadcast %11 : f32 to vector<8x64xf32>
    %15 = arith.mulf %14, %10 : vector<8x64xf32>
    %16 = arith.select %13, %10, %15 : vector<8x64xi1>, vector<8x64xf32>
    %c0_9 = arith.constant 0 : index
    %c0_10 = arith.constant 0 : index
    %17 = vector.load %arg6[%c0_9, %c0_10] : memref<64x32xf32, #tpu.memory_space<vmem>>, vector<64x32xf32>
    %cst_11 = arith.constant dense<0.000000e+00> : vector<8x32xf32>
    %18 = tpu.matmul %16, %17, %cst_11 {dimension_numbers = #tpu.dot_dimension_numbers<[1], [0], [0], [1], [0, 0, 1, 1], [], []>} : vector<8x64xf32>, vector<64x32xf32>, vector<8x32xf32> -> vector<8x32xf32>
    %c0_12 = arith.constant 0 : index
    %c0_13 = arith.constant 0 : index
    %19 = vector.load %arg7[%c0_12, %c0_13] : memref<1x32xf32, #tpu.memory_space<vmem>>, vector<1x32xf32>
    %20 = vector.broadcast %19 : vector<1x32xf32> to vector<8x32xf32>
    %21 = arith.addf %18, %20 : vector<8x32xf32>
    %c0_14 = arith.constant 0 : index
    %c0_15 = arith.constant 0 : index
    %22 = vector.load %arg8[%c0_14, %c0_15] : memref<8x32xf32, #tpu.memory_space<vmem>>, vector<8x32xf32>
    tpu.vector_store %arg8[%c0_14, %c0_15], %21 {strides = array<i32>} : memref<8x32xf32, #tpu.memory_space<vmem>>, vector<8x32xf32>,
    return
  }
  func.func @transform_0(%arg0: i32) -> i32 {
    %c0_i32 = arith.constant 0 : i32
    %c0_i32_0 = arith.constant 0 : i32
    return %c0_i32 : i32
  }
  func.func @transform_1(%arg0: i32) -> (i32, i32) {
    %c0_i32 = arith.constant 0 : i32
    %c0_i32_0 = arith.constant 0 : i32
    return %arg0, %c0_i32 : i32, i32
  }
  func.func @transform_2(%arg0: i32) -> (i32, i32) {
    %c0_i32 = arith.constant 0 : i32
    %c0_i32_0 = arith.constant 0 : i32
    %c0_i32_1 = arith.constant 0 : i32
    return %c0_i32, %c0_i32_0 : i32, i32
  }
  func.func @transform_3(%arg0: i32) -> (i32, i32) {
    %c0_i32 = arith.constant 0 : i32
    %c0_i32_0 = arith.constant 0 : i32
    %c0_i32_1 = arith.constant 0 : i32
    return %c0_i32, %c0_i32_0 : i32, i32
  }
  func.func @transform_4(%arg0: i32) -> (i32, i32) {
    %c0_i32 = arith.constant 0 : i32
    %c0_i32_0 = arith.constant 0 : i32
    %c0_i32_1 = arith.constant 0 : i32
    return %c0_i32, %c0_i32_0 : i32, i32
  }
  func.func @transform_5(%arg0: i32) -> (i32, i32) {
    %c0_i32 = arith.constant 0 : i32
    %c0_i32_0 = arith.constant 0 : i32
    %c0_i32_1 = arith.constant 0 : i32
    return %c0_i32, %c0_i32_0 : i32, i32
  }
  func.func @transform_6(%arg0: i32) -> (i32, i32) {
    %c0_i32 = arith.constant 0 : i32
    %c0_i32_0 = arith.constant 0 : i32
    %c0_i32_1 = arith.constant 0 : i32
    return %c0_i32, %c0_i32_0 : i32, i32
  }
  func.func @transform_7(%arg0: i32) -> (i32, i32) {
    %c0_i32 = arith.constant 0 : i32
    %c0_i32_0 = arith.constant 0 : i32
    return %arg0, %c0_i32 : i32, i32
  }
}

</mosaic_0001>

<llo_original>
// kernel: tpu_custom_call.1
$region0: #{tpu_custom_call.1}
  #allocation0 [shape = 'u32[]', space=smem, size = 0x4, offset = 0x4, fixed_abs, tag = 'smem constant byte address 0x4 - core index']
  #allocation1 [shape = 'u32[72,128]{1,0:T(1,128)}', space=vmem, size = 0x9000, scoped, tag = 'internal scratch']
  #allocation2 [shape = 'f32[1]{0:T(128)S(6)}', space=smem, size = 0x200, scoped, tag = 'scoped memory for tpu_custom_call.1']
  %s0 = inlined_call_operand.<no memory space> [shape: f32[1], index: 0, kind: input, shape index: {}]
  %s1 = inlined_call_operand.vmem [shape: f32[16,1], index: 1, kind: input, shape index: {}]
  %s2 = inlined_call_operand.vmem [shape: f32[1,64], index: 2, kind: input, shape index: {}]
  %s3 = inlined_call_operand.vmem [shape: f32[64,64], index: 3, kind: input, shape index: {}]
  %s4 = inlined_call_operand.vmem [shape: f32[1,64], index: 4, kind: input, shape index: {}]
  %s5 = inlined_call_operand.vmem [shape: f32[64,32], index: 5, kind: input, shape index: {}]
  %s6 = inlined_call_operand.vmem [shape: f32[1,32], index: 6, kind: input, shape index: {}]
  %s7 = inlined_call_operand.hbm [shape: f32[16,32], index: 7, kind: output, shape index: {}]
  %s8 = sld [smem:[#allocation0]]
  $region61: #{tpu_custom_call.1} parent=0
    _
  %s10 = ssub.s32 1, %s8
  %s11 = scalar_select 0, %s10, %s8
  %12 = sst [smem:[#allocation2]] %s0
  $region1: #{tpu_custom_call.1} parent=0
    #allocation3 [shape = 'u8[8192]{0}', space=vmem, size = 0x2000, scoped, tag = 'output window, operand 0']
    #allocation4 [shape = 's32[2]{0}', space=sflag, size = 0x8, scoped, tag = 'scoped memory for tpu_custom_call.1']
    %13 = vsyncpa [#allocation4], 0
    %s14 = scalar_lea.sflag [#allocation4], 1
    %15 = vsyncpa %s14, 0
    loop: start=0, step=1, limit=4
    $region2: #{tpu_custom_call.1} parent=1 // loop_pre_header
      _
    $region3: #{tpu_custom_call.1} parent=1 // loop_header
      %s17 = sphi 0, %s21
      %p18 = scmp.ge.s32.totalorder %s17, 4
      %s25 = sphi 0, %s25
      %s27 = sphi 0, %s25
      %s28 = sphi 0, %s27
      %s42 = sphi 0, %s28
      %s48 = sphi 0, %s50
      %s51 = sphi 0, %s48
      %s52 = sphi 0, %s51
      %s68 = sphi 0, %s52
      %s72 = sphi 0, %s72
      %s74 = sphi 0, %s72
      %s75 = sphi 0, %s74
      %s89 = sphi 0, %s75
      %s93 = sphi 0, %s93
      %s95 = sphi 0, %s93
      %s96 = sphi 0, %s95
      %s110 = sphi 0, %s96
      %s114 = sphi 0, %s114
      %s116 = sphi 0, %s114
      %s117 = sphi 0, %s116
      %s131 = sphi 0, %s117
      %s135 = sphi 0, %s135
      %s137 = sphi 0, %s135
      %s138 = sphi 0, %s137
      %s152 = sphi 0, %s138
      %s156 = sphi 0, %s156
      %s158 = sphi 0, %s156
      %s159 = sphi 0, %s158
      %s173 = sphi 0, %s159
      %s179 = sphi 0, %s181
      %s182 = sphi 0, %s179
      %s183 = sphi 0, %s182
      %s199 = sphi 0, %s183
    $region4: #{tpu_custom_call.1} parent=1 // loop_header_branch
      %20 = sbr.rel (%p18) target = $region8
    $region5: #{tpu_custom_call.1} parent=1 // loop_body
      %s22 = ssub.s32 %s17, 1
      %s23 = ssub.s32 %s17, 2
      %s24 = sadd.s32 %s17, 1
      %s26 = sadd.s32 %s25, 1
      %p29 = scmp.eq.s32.totalorder %s17, 1
      %p30 = scmp.ne.s32.totalorder %s25, %s27
      %p31 = scmp.eq.s32.totalorder %s17, 0
      %p32 = por %p30, %p31
      %p33 = scmp.ne.s32.totalorder %s25, %s27
      %p34 = scmp.eq.s32.totalorder %s22, 1
      %p35 = por %p33, %p34
      %p36 = scmp.ne.s32.totalorder %s27, %s28
      %p37 = scmp.eq.s32.totalorder %s22, 0
      %p38 = por %p36, %p37
      %p39 = scmp.ne.s32.totalorder %s27, %s28
      %p40 = scmp.eq.s32.totalorder %s23, 1
      %p41 = por %p39, %p40
      %p43 = scmp.ne.s32.totalorder %s28, %s42
      %p44 = scmp.eq.s32.totalorder %s23, 0
      %p45 = por %p43, %p44
      %s46 = ssub.s32 %s17, %s24
      %p47 = scmp.eq.s32.totalorder %s46, 0
      %s49 = sadd.s32 %s48, 1
      %s50 = scalar_select %p47, %s48, %s49
      %p53 = pneg %p47
      %p54 = scmp.eq.s32.totalorder %s17, 1
      %p55 = por %p53, %p54
      %p56 = scmp.ne.s32.totalorder %s48, %s51
      %p57 = scmp.eq.s32.totalorder %s17, 0
      %p58 = por %p56, %p57
      %p59 = scmp.ne.s32.totalorder %s48, %s51
      %p60 = scmp.eq.s32.totalorder %s22, 1
      %p61 = por %p59, %p60
      %p62 = scmp.ne.s32.totalorder %s51, %s52
      %p63 = scmp.eq.s32.totalorder %s22, 0
      %p64 = por %p62, %p63
      %p65 = scmp.ne.s32.totalorder %s51, %s52
      %p66 = scmp.eq.s32.totalorder %s23, 1
      %p67 = por %p65, %p66
      %p69 = scmp.ne.s32.totalorder %s52, %s68
      %p70 = scmp.eq.s32.totalorder %s23, 0
      %p71 = por %p69, %p70
      %s73 = sadd.s32 %s72, 1
      %p76 = scmp.eq.s32.totalorder %s17, 1
      %p77 = scmp.ne.s32.totalorder %s72, %s74
      %p78 = scmp.eq.s32.totalorder %s17, 0
      %p79 = por %p77, %p78
      %p80 = scmp.ne.s32.totalorder %s72, %s74
      %p81 = scmp.eq.s32.totalorder %s22, 1
      %p82 = por %p80, %p81
      %p83 = scmp.ne.s32.totalorder %s74, %s75
      %p84 = scmp.eq.s32.totalorder %s22, 0
      %p85 = por %p83, %p84
      %p86 = scmp.ne.s32.totalorder %s74, %s75
      %p87 = scmp.eq.s32.totalorder %s23, 1
      %p88 = por %p86, %p87
      %p90 = scmp.ne.s32.totalorder %s75, %s89
      %p91 = scmp.eq.s32.totalorder %s23, 0
      %p92 = por %p90, %p91
      %s94 = sadd.s32 %s93, 1
      %p97 = scmp.eq.s32.totalorder %s17, 1
      %p98 = scmp.ne.s32.totalorder %s93, %s95
      %p99 = scmp.eq.s32.totalorder %s17, 0
      %p100 = por %p98, %p99
      %p101 = scmp.ne.s32.totalorder %s93, %s95
      %p102 = scmp.eq.s32.totalorder %s22, 1
      %p103 = por %p101, %p102
      %p104 = scmp.ne.s32.totalorder %s95, %s96
      %p105 = scmp.eq.s32.totalorder %s22, 0
      %p106 = por %p104, %p105
      %p107 = scmp.ne.s32.totalorder %s95, %s96
      %p108 = scmp.eq.s32.totalorder %s23, 1
      %p109 = por %p107, %p108
      %p111 = scmp.ne.s32.totalorder %s96, %s110
      %p112 = scmp.eq.s32.totalorder %s23, 0
      %p113 = por %p111, %p112
      %s115 = sadd.s32 %s114, 1
      %p118 = scmp.eq.s32.totalorder %s17, 1
      %p119 = scmp.ne.s32.totalorder %s114, %s116
      %p120 = scmp.eq.s32.totalorder %s17, 0
      %p121 = por %p119, %p120
      %p122 = scmp.ne.s32.totalorder %s114, %s116
      %p123 = scmp.eq.s32.totalorder %s22, 1
      %p124 = por %p122, %p123
      %p125 = scmp.ne.s32.totalorder %s116, %s117
      %p126 = scmp.eq.s32.totalorder %s22, 0
      %p127 = por %p125, %p126
      %p128 = scmp.ne.s32.totalorder %s116, %s117
      %p129 = scmp.eq.s32.totalorder %s23, 1
      %p130 = por %p128, %p129
      %p132 = scmp.ne.s32.totalorder %s117, %s131
      %p133 = scmp.eq.s32.totalorder %s23, 0
      %p134 = por %p132, %p133
      %s136 = sadd.s32 %s135, 1
      %p139 = scmp.eq.s32.totalorder %s17, 1
      %p140 = scmp.ne.s32.totalorder %s135, %s137
      %p141 = scmp.eq.s32.totalorder %s17, 0
      %p142 = por %p140, %p141
      %p143 = scmp.ne.s32.totalorder %s135, %s137
      %p144 = scmp.eq.s32.totalorder %s22, 1
      %p145 = por %p143, %p144
      %p146 = scmp.ne.s32.totalorder %s137, %s138
      %p147 = scmp.eq.s32.totalorder %s22, 0
      %p148 = por %p146, %p147
      %p149 = scmp.ne.s32.totalorder %s137, %s138
      %p150 = scmp.eq.s32.totalorder %s23, 1
      %p151 = por %p149, %p150
      %p153 = scmp.ne.s32.totalorder %s138, %s152
      %p154 = scmp.eq.s32.totalorder %s23, 0
      %p155 = por %p153, %p154
      %s157 = sadd.s32 %s156, 1
      %p160 = scmp.eq.s32.totalorder %s17, 1
      %p161 = scmp.ne.s32.totalorder %s156, %s158
      %p162 = scmp.eq.s32.totalorder %s17, 0
      %p163 = por %p161, %p162
      %p164 = scmp.ne.s32.totalorder %s156, %s158
      %p165 = scmp.eq.s32.totalorder %s22, 1
      %p166 = por %p164, %p165
      %p167 = scmp.ne.s32.totalorder %s158, %s159
      %p168 = scmp.eq.s32.totalorder %s22, 0
      %p169 = por %p167, %p168
      %p170 = scmp.ne.s32.totalorder %s158, %s159
      %p171 = scmp.eq.s32.totalorder %s23, 1
      %p172 = por %p170, %p171
      %p174 = scmp.ne.s32.totalorder %s159, %s173
      %p175 = scmp.eq.s32.totalorder %s23, 0
      %p176 = por %p174, %p175
      %s177 = ssub.s32 %s17, %s24
      %p178 = scmp.eq.s32.totalorder %s177, 0
      %s180 = sadd.s32 %s179, 1
      %s181 = scalar_select %p178, %s179, %s180
      %p184 = pneg %p178
      %p185 = scmp.eq.s32.totalorder %s17, 1
      %p186 = por %p184, %p185
      %p187 = scmp.ne.s32.totalorder %s179, %s182
      %p188 = scmp.eq.s32.totalorder %s17, 0
      %p189 = por %p187, %p188
      %p190 = scmp.ne.s32.totalorder %s179, %s182
      %p191 = scmp.eq.s32.totalorder %s22, 1
      %p192 = por %p190, %p191
      %p193 = scmp.ne.s32.totalorder %s182, %s183
      %p194 = scmp.eq.s32.totalorder %s22, 0
      %p195 = por %p193, %p194
      %p196 = scmp.ne.s32.totalorder %s182, %s183
      %p197 = scmp.eq.s32.totalorder %s23, 1
      %p198 = por %p196, %p197
      %p200 = scmp.ne.s32.totalorder %s183, %s199
      %p201 = scmp.eq.s32.totalorder %s23, 0
      %p202 = por %p200, %p201
      %p203 = scmp.le.s32.totalorder 1, %s17
      %p204 = scmp.lt.s32.totalorder %s17, 3
      %p205 = pnand %p203, %p204
      %p206 = pneg %p205
      // Predicated region
      $region9: #{tpu_custom_call.1} parent=5 // pred_check
        _
      $region10: #{tpu_custom_call.1} parent=5 // pred_check_branch
        %208 = sbr.rel (%p205) target = $region12
      $region11: #{tpu_custom_call.1} parent=5 // pred_region
        %s209 = ssub.s32 %s17, 1
        // Predicated region
        $region13: #{tpu_custom_call.1} parent=11 // pred_check
          %p210 = pneg %p38
        $region14: #{tpu_custom_call.1} parent=11 // pred_check_branch
          %212 = sbr.rel (%p210) target = $region16
        $region15: #{tpu_custom_call.1} parent=11 // pred_region
          _
        $region16: #{tpu_custom_call.1} parent=11 // pred_fallthru
          _
        // Predicated region
        $region17: #{tpu_custom_call.1} parent=11 // pred_check
          %p213 = pneg %p85
        $region18: #{tpu_custom_call.1} parent=11 // pred_check_branch
          %215 = sbr.rel (%p213) target = $region20
        $region19: #{tpu_custom_call.1} parent=11 // pred_region
          _
        $region20: #{tpu_custom_call.1} parent=11 // pred_fallthru
          _
        // Predicated region
        $region21: #{tpu_custom_call.1} parent=11 // pred_check
          %p216 = pneg %p106
        $region22: #{tpu_custom_call.1} parent=11 // pred_check_branch
          %218 = sbr.rel (%p216) target = $region24
        $region23: #{tpu_custom_call.1} parent=11 // pred_region
          _
        $region24: #{tpu_custom_call.1} parent=11 // pred_fallthru
          _
        // Predicated region
        $region25: #{tpu_custom_call.1} parent=11 // pred_check
          %p219 = pneg %p127
        $region26: #{tpu_custom_call.1} parent=11 // pred_check_branch
          %221 = sbr.rel (%p219) target = $region28
        $region27: #{tpu_custom_call.1} parent=11 // pred_region
          _
        $region28: #{tpu_custom_call.1} parent=11 // pred_fallthru
          _
        // Predicated region
        $region29: #{tpu_custom_call.1} parent=11 // pred_check
          %p222 = pneg %p148
        $region30: #{tpu_custom_call.1} parent=11 // pred_check_branch
          %224 = sbr.rel (%p222) target = $region32
        $region31: #{tpu_custom_call.1} parent=11 // pred_region
          _
        $region32: #{tpu_custom_call.1} parent=11 // pred_fallthru
          _
        // Predicated region
        $region33: #{tpu_custom_call.1} parent=11 // pred_check
          %p225 = pneg %p169
        $region34: #{tpu_custom_call.1} parent=11 // pred_check_branch
          %227 = sbr.rel (%p225) target = $region36
        $region35: #{tpu_custom_call.1} parent=11 // pred_region
          _
        $region36: #{tpu_custom_call.1} parent=11 // pred_fallthru
          _
      $region12: #{tpu_custom_call.1} parent=5 // pred_fallthru
        _
      %p228 = scmp.lt.s32.totalorder %s17, 2
      // Predicated region
      $region37: #{tpu_custom_call.1} parent=5 // pred_check
        %p229 = pneg %p228
      $region38: #{tpu_custom_call.1} parent=5 // pred_check_branch
        %231 = sbr.rel (%p229) target = $region40
      $region39: #{tpu_custom_call.1} parent=5 // pred_region
        // Predicated region
        $region41: #{tpu_custom_call.1} parent=39 // pred_check
          %p232 = pneg %p58
        $region42: #{tpu_custom_call.1} parent=39 // pred_check_branch
          %234 = sbr.rel (%p232) target = $region44
        $region43: #{tpu_custom_call.1} parent=39 // pred_region
          %p235 = scmp.lt.s32.totalorder %s17, 1
          %s236 = scalar_select %p235, %s17, 1
          %s237 = smul.addr %s236, 8
          %s238 = scalar_lea.vmem %s1, %s237
        $region44: #{tpu_custom_call.1} parent=39 // pred_fallthru
          _
      $region40: #{tpu_custom_call.1} parent=5 // pred_fallthru
        _
      %p239 = scmp.le.s32.totalorder 1, %s17
      %p240 = scmp.lt.s32.totalorder %s17, 3
      %p241 = pnand %p239, %p240
      %p242 = pneg %p241
      // Predicated region
      $region45: #{tpu_custom_call.1} parent=5 // pred_check
        _
      $region46: #{tpu_custom_call.1} parent=5 // pred_check_branch
        %244 = sbr.rel (%p241) target = $region48
      $region47: #{tpu_custom_call.1} parent=5 // pred_region
        %s245 = ssub.s32 %s17, 1
        %p246 = pneg %p38
        %p247 = pneg %p35
        %p248 = scmp.lt.s32.totalorder %s22, 1
        %s249 = scalar_select %p248, %s22, 1
        %s250 = smul.addr %s249, 8
        %s251 = scalar_lea.vmem %s1, %s250
        %p252 = pneg %p64
        %p253 = pneg %p61
        %p254 = pneg %p85
        %p255 = pneg %p82
        %p256 = pneg %p106
        %p257 = pneg %p103
        %p258 = pneg %p127
        %p259 = pneg %p124
        %p260 = pneg %p148
        %p261 = pneg %p145
        %p262 = pneg %p169
        %p263 = pneg %p166
        %p264 = pneg %p195
        %p265 = pneg %p192
        %s266 = sand.u32 %s182, 1
        %s267 = scalar_lea.sflag [#allocation4], %s266
        %s268 = sand.u32 %s182, 1
        %s269 = smul.addr %s268, 8
        %s270 = scalar_lea.vmem [#allocation3], %s269
        %p271 = scmp.lt.s32.totalorder %s22, 1
        %s272 = scalar_select %p271, %s22, 1
        %s273 = smul.addr %s272, 8
        %s274 = scalar_lea.vmem %s1, %s273
        %v275 = vld [vmem:[%s274] sm:$0xff]
        %v276 = vld [vmem:[%s2] sm:$0x1]
        %278 = vset.pattern.permute.xlu0 0
        %279 = vperm.xlu0 %278, %v275
        %v280 = vpop.permute.xlu0 %279
        %v283 = vperm.slane %v276, 0
        %v285 = vmul.f32 %v280, %v283
        %v286 = vand.u32 2147483647, %v285
        %vm287 = vcmp.le.f32.partialorder %v286, 0.7853982
        %vm288 = vcmp.lt.s32.totalorder %v285, 0
        %v289 = vand.u32 %v285, 2139095040
        %v290 = vshrl.u32 %v289, 23
        %v291 = vsub.s32 %v290, 127
        %v292 = vand.u32 2147483647, %v285
        %v293 = vand.u32 %v292, 8388607
        %v294 = vor.u32 %v293, 8388608
        %v295 = vsub.s32 0, %v294
        %v296 = vadd.s32 %v291, 1
        %vm297 = vcmp.gt.s32.totalorder %v296, 0
        %v298 = vsel %vm297, %v296, 0
        %v299 = vshrl.u32 %v298, 5
        %v300 = vand.u32 %v298, 31
        %v301 = vsub.s32 32, %v300
        %v302 = vshrl.u32 683565275, %v301
        %v303 = vshll.u32 683565275, %v300
        %v304 = vshrl.u32 2475754826, %v301
        %v305 = vor.u32 %v303, %v304
        %v306 = vshll.u32 2475754826, %v300
        %v307 = vshrl.u32 2131351028, %v301
        %v308 = vor.u32 %v306, %v307
        %v309 = vshll.u32 2131351028, %v300
        %v310 = vshrl.u32 2102212464, %v301
        %v311 = vor.u32 %v309, %v310
        %v312 = vshll.u32 2102212464, %v300
        %v313 = vshrl.u32 920167782, %v301
        %v314 = vor.u32 %v312, %v313
        %v315 = vshll.u32 920167782, %v300
        %v316 = vshrl.u32 1326507024, %v301
        %v317 = vor.u32 %v315, %v316
        %vm318 = vcmp.lt.s32.totalorder %v299, 1
        %vm319 = vcmp.lt.s32.totalorder %v299, 2
        %vm320 = vcmp.lt.s32.totalorder %v299, 3
        %vm321 = vcmp.lt.s32.totalorder %v299, 4
        %v322 = vsel %vm318, %v302, %v305
        %v323 = vsel %vm321, %v311, 2102212464
        %v324 = vsel %vm320, %v308, %v323
        %v325 = vsel %vm319, %v322, %v324
        %v326 = vsel %vm318, %v305, %v308
        %v327 = vsel %vm321, %v314, 920167782
        %v328 = vsel %vm320, %v311, %v327
        %v329 = vsel %vm319, %v326, %v328
        %v330 = vsel %vm318, %v308, %v311
        %v331 = vsel %vm321, %v317, 1326507024
        %v332 = vsel %vm320, %v314, %v331
        %v333 = vsel %vm319, %v330, %v332
        %v334 = vshll.u32 %v294, 8
        %v335 = vand.u32 %v334, 65535
        %v336 = vshrl.u32 %v334, 16
        %v337 = vand.u32 %v333, 65535
        %v338 = vshrl.u32 %v333, 16
        %v339 = vmul.u32 %v335, %v337
        %v340 = vmul.u32 %v335, %v338
        %v341 = vmul.u32 %v336, %v337
        %v342 = vmul.u32 %v336, %v338
        %v343 = vshll.u32 %v340, 16
        %v344 = vshrl.u32 %v340, 16
        %v345 = vshll.u32 %v341, 16
        %v346 = vshrl.u32 %v341, 16
        %vm347 = vc.u32 %v339, %v343
        %v348 = vsel %vm347, 1, 0
        %v349 = vadd.s32 %v339, %v343
        %v350 = vadd.s32 %v342, %v348
        %vm351 = vc.u32 %v349, %v345
        %v352 = vsel %vm351, 1, 0
        %v353 = vadd.s32 %v349, %v345
        %v354 = vadd.s32 %v350, %v352
        %v355 = vadd.s32 %v354, %v344
        %v356 = vadd.s32 %v355, %v346
        %v357 = vand.u32 %v334, 65535
        %v358 = vshrl.u32 %v334, 16
        %v359 = vand.u32 %v329, 65535
        %v360 = vshrl.u32 %v329, 16
        %v361 = vmul.u32 %v357, %v359
        %v362 = vmul.u32 %v357, %v360
        %v363 = vmul.u32 %v358, %v359
        %v364 = vmul.u32 %v358, %v360
        %v365 = vshll.u32 %v362, 16
        %v366 = vshrl.u32 %v362, 16
        %v367 = vshll.u32 %v363, 16
        %v368 = vshrl.u32 %v363, 16
        %vm369 = vc.u32 %v361, %v365
        %v370 = vsel %vm369, 1, 0
        %v371 = vadd.s32 %v361, %v365
        %v372 = vadd.s32 %v364, %v370
        %vm373 = vc.u32 %v371, %v367
        %v374 = vsel %vm373, 1, 0
        %v375 = vadd.s32 %v371, %v367
        %v376 = vadd.s32 %v372, %v374
        %v377 = vadd.s32 %v376, %v366
        %v378 = vadd.s32 %v377, %v368
        %v379 = vmul.u32 %v334, %v325
        %v380 = vadd.s32 %v356, %v375
        %vm381 = vc.u32 %v356, %v375
        %v382 = vadd.s32 %v378, 1
        %v383 = vsel %vm381, %v382, %v378
        %v384 = vadd.s32 %v379, %v383
        %v385 = vadd.s32 %v384, 536870912
        %v386 = vshrl.u32 %v385, 30
        %v387 = vshll.u32 %v386, 30
        %v388 = vsub.s32 %v384, %v387
        %vm389 = vcmp.lt.s32.totalorder %v388, 0
        %v390 = vsub.s32 0, %v388
        %v391 = vsel %vm389, %v390, %v388
        %v392 = vclz %v391
        %v393 = vsub.s32 %v392, 2
        %vm394 = vcmp.gt.s32.totalorder 0, %v393
        %v395 = vsel %vm394, 0, %v393
        %v396 = vsub.s32 32, %v395
        %v397 = vshll.u32 %v388, %v395
        %v398 = vshrl.u32 %v380, %v396
        %v399 = vor.u32 %v397, %v398
        %v400 = vsub.s32 4294967266, %v395
        %v401 = vadd.s32 %v400, 127
        %v402 = vshll.u32 %v401, 23
        %v403 = vor.u32 4788187, %v402
        %v404 = vand.u32 2147483647, %v403
        %v406 = vcvt.s32.f32 %v399
        %v407 = vmul.f32 %v406, %v404
        %v408 = vxor.u32 %v407, 2147483648
        %v409 = vsel %vm288, %v408, %v407
        %v410 = vsub.s32 4, %v386
        %v411 = vsel %vm288, %v410, %v386
        %v412 = vsel %vm287, %v285, %v409
        %v413 = vsel %vm287, 0, %v411
        %v414 = vmul.f32 %v412, %v412
        %v415 = vmul.f32 %v414, -0.001358992
        %v416 = vadd.f32 %v415, 0.041655596
        %v417 = vmul.f32 %v414, %v416
        %v418 = vadd.f32 %v417, -0.4999988
        %v419 = vmul.f32 %v414, %v418
        %v420 = vadd.f32 1.0, %v419
        %v421 = vmul.f32 %v412, %v412
        %v422 = vmul.f32 %v421, -0.00019511016
        %v423 = vadd.f32 %v422, 0.008332121
        %v424 = vmul.f32 %v421, %v423
        %v425 = vadd.f32 %v424, -0.16666654
        %v426 = vmul.f32 %v421, %v425
        %v427 = vadd.f32 %v426, 1.0
        %v428 = vmul.f32 %v427, %v412
        %vm429 = vweird.f32 %v285
        %v430 = vand.u32 %v413, 3
        %vm431 = vcmp.lt.s32.totalorder %v430, 2
        %vm432 = vcmp.eq.s32.totalorder %v430, 0
        %v433 = vxor.u32 %v428, 2147483648
        %v434 = vsel %vm432, %v420, %v433
        %vm435 = vcmp.eq.s32.totalorder %v430, 2
        %v436 = vxor.u32 %v420, 2147483648
        %v437 = vsel %vm435, %v436, %v428
        %v438 = vsel %vm431, %v434, %v437
        %v439 = vsel %vm429, nan, %v438
        %v440 = vld [vmem:[%s3] sm:$0xff]
        %v441 = vld [vmem:[%s3 + $0x8] sm:$0xff]
        %v442 = vld [vmem:[%s3 + $0x10] sm:$0xff]
        %v443 = vld [vmem:[%s3 + $0x18] sm:$0xff]
        %v444 = vld [vmem:[%s3 + $0x20] sm:$0xff]
        %v445 = vld [vmem:[%s3 + $0x28] sm:$0xff]
        %v446 = vld [vmem:[%s3 + $0x30] sm:$0xff]
        %v447 = vld [vmem:[%s3 + $0x38] sm:$0xff]
        %v448 = vld [vmem:[%s4] sm:$0x1]
        %v450 = vperm.slane %v448, 0
        %vm452 = vcmask 523264
        %v454 = vsel %vm452, %v439, 0
        %456 = vmatpush.msra.mxu0 0.0
        %457 = vmatpush.msra.mxu0 0.0
        %458 = vmatpush.msra.mxu0 0.0
        %459 = vmatpush.msra.mxu0 0.0
        %460 = vmatpush.msra.mxu0 0.0
        %461 = vmatpush.msra.mxu0 0.0
        %462 = vmatpush.msra.mxu0 0.0
        %463 = vmatpush.msra.mxu0 0.0
        %464 = vmatpush.msra.mxu0 %v447
        %465 = vmatpush.msra.mxu0 %v446
        %466 = vmatpush.msra.mxu0 %v445
        %467 = vmatpush.msra.mxu0 %v444
        %468 = vmatpush.msra.mxu0 %v443
        %469 = vmatpush.msra.mxu0 %v442
        %470 = vmatpush.msra.mxu0 %v441
        %471 = vmatpush.msra.mxu0 %v440
        %472 = vmatmul.f32.gmra.mxu0 %v454
        %v473 = vpop.f32.mrf.mxu0
        %v474 = vadd.f32 %v450, %v473
        %475 = vdwg.mxu0
        %s476 = sld [smem:[#allocation2]]
        %vm477 = vcmp.gt.f32.partialorder %v474, 0.0
        %v478 = vstv %s476
        %v479 = vmul.f32 %v478, %v474
        %v480 = vsel %vm477, %v474, %v479
        %v481 = vld [vmem:[%s5] sm:$0xff]
        %v482 = vld [vmem:[%s5 + $0x8] sm:$0xff]
        %v483 = vld [vmem:[%s5 + $0x10] sm:$0xff]
        %v484 = vld [vmem:[%s5 + $0x18] sm:$0xff]
        %v485 = vld [vmem:[%s5 + $0x20] sm:$0xff]
        %v486 = vld [vmem:[%s5 + $0x28] sm:$0xff]
        %v487 = vld [vmem:[%s5 + $0x30] sm:$0xff]
        %v488 = vld [vmem:[%s5 + $0x38] sm:$0xff]
        %v489 = vld [vmem:[%s6] sm:$0x1]
        %v491 = vperm.slane %v489, 0
        %v494 = vsel %vm452, %v480, 0
        %496 = vmatpush.msra.mxu0 0.0
        %497 = vmatpush.msra.mxu0 0.0
        %498 = vmatpush.msra.mxu0 0.0
        %499 = vmatpush.msra.mxu0 0.0
        %500 = vmatpush.msra.mxu0 0.0
        %501 = vmatpush.msra.mxu0 0.0
        %502 = vmatpush.msra.mxu0 0.0
        %503 = vmatpush.msra.mxu0 0.0
        %504 = vmatpush.msra.mxu0 %v488
        %505 = vmatpush.msra.mxu0 %v487
        %506 = vmatpush.msra.mxu0 %v486
        %507 = vmatpush.msra.mxu0 %v485
        %508 = vmatpush.msra.mxu0 %v484
        %509 = vmatpush.msra.mxu0 %v483
        %510 = vmatpush.msra.mxu0 %v482
        %511 = vmatpush.msra.mxu0 %v481
        %512 = vmatmul.f32.gmra.mxu0 %v494
        %v513 = vpop.f32.mrf.mxu0
        %v514 = vadd.f32 %v491, %v513
        %515 = vdwg.mxu0
        %vm516 = vcmask 261120
        %517 = vst.msk [vmem:[%s270] sm:$0xff] %vm516, %v514
        %s518 = sand.u32 %s182, 1
        %s519 = scalar_lea.sflag [#allocation4], %s518
        %s520 = sand.u32 %s182, 1
        %s521 = smul.addr %s520, 8
        %s522 = scalar_lea.vmem [#allocation3], %s521
        // Predicated region
        $region49: #{tpu_custom_call.1} parent=47 // pred_check
          %p523 = pneg %p192
        $region50: #{tpu_custom_call.1} parent=47 // pred_check_branch
          %525 = sbr.rel (%p523) target = $region52
        $region51: #{tpu_custom_call.1} parent=47 // pred_region
          %527 = vsyncadd %s519, 0
          %s528 = smul.addr %s22, 8
          %s529 = scalar_lea.hbm %s7, %s528
          %s531 = sshll.u32 %s522, 4
          %s532 = int_to_ptr.vmem [resolvable:$true] %s531
          %s533 = sshll.u32 %s529, 4
          %s534 = int_to_ptr.hbm [resolvable:$true] %s533
          %536 = dma.vmem_to_hbm [thread:$0]  %s532, 128, %s534, %s519
        $region52: #{tpu_custom_call.1} parent=47 // pred_fallthru
          _
      $region48: #{tpu_custom_call.1} parent=5 // pred_fallthru
        _
      %p537 = scmp.le.s32.totalorder 2, %s17
      // Predicated region
      $region53: #{tpu_custom_call.1} parent=5 // pred_check
        %p538 = pneg %p537
      $region54: #{tpu_custom_call.1} parent=5 // pred_check_branch
        %540 = sbr.rel (%p538) target = $region56
      $region55: #{tpu_custom_call.1} parent=5 // pred_region
        %s541 = ssub.s32 %s17, 2
        // Predicated region
        $region57: #{tpu_custom_call.1} parent=55 // pred_check
          %p542 = pneg %p198
        $region58: #{tpu_custom_call.1} parent=55 // pred_check_branch
          %544 = sbr.rel (%p542) target = $region60
        $region59: #{tpu_custom_call.1} parent=55 // pred_region
          %s545 = sand.u32 %s183, 1
          %s546 = scalar_lea.sflag [#allocation4], %s545
          %s547 = sand.u32 %s183, 1
          %s548 = smul.addr %s547, 8
          %s549 = scalar_lea.vmem [#allocation3], %s548
          %551 = dma.done %s546, 128
        $region60: #{tpu_custom_call.1} parent=55 // pred_fallthru
          _
      $region56: #{tpu_custom_call.1} parent=5 // pred_fallthru
        _
    $region6: #{tpu_custom_call.1} parent=1 // loop_footer
      %s21 = sadd.s32 1, %s17
    $region7: #{tpu_custom_call.1} parent=1 // loop_footer_branch
      %16 = sbr.rel target = $region3
    $region8: #{tpu_custom_call.1} parent=1 // loop_exit
      _
    %552 = vsyncpa [#allocation4], 1
    %s553 = scalar_lea.sflag [#allocation4], 1
    %554 = vsyncpa %s553, 1

</llo_original>
